<compile_context>
chip_gen: v7x
topology: tpu7x:2x2x1
jax: 0.10.0
libtpu: 0.0.40
codegen_flags: <defaults>
</compile_context>

<pallas_src>
import jax
import jax.numpy as jnp
from jax.experimental import pallas as pl
from jax.experimental.pallas import tpu as pltpu

_LANE = 128
_SUBLANE = 8


def _cdiv(a, b):
    return -(-a // b)


def _sublane_multiple(dtype):
    # Minimum sublane tile: 8 for 4-byte, 16 for 2-byte, 32 for 1-byte dtypes.
    return max(_SUBLANE, (4 * _SUBLANE) // jnp.dtype(dtype).itemsize)


def _default_num_shards():
    # Two TensorCores per chip only on v7x; elsewhere the extra shard axis is
    # just a serial loop, so default to 1.
    try:
        kind = jax.devices()[0].device_kind.lower()
    except Exception:
        return 1
    return 2 if ("v7" in kind or "tpu7" in kind) else 1


def focal_loss(pred, gt, *, tile_rows=8192, num_shards=None):
    """Pallas implementation of CenterFace `_neg_loss(pred, gt)`. Scalar f32."""
    assert pred.shape == gt.shape
    n = int(pred.size)
    if num_shards is None:
        num_shards = _default_num_shards()

    pred_f = pred.reshape(-1)
    gt_f = gt.reshape(-1)

    # Value padding only when the flat length is not a multiple of the minimum
    # (sublane, lane) chunk: pred pad = 0.0 (log argument becomes 1.0 -> 0),
    # gt pad = 2.0 (fails both gt==1 and gt<1), so padded elements contribute
    # exactly zero with NO per-element mask in the kernel.
    sm = max(_sublane_multiple(pred.dtype), _sublane_multiple(gt.dtype))
    chunk = sm * _LANE
    n_pad = _cdiv(n, chunk) * chunk
    if n_pad != n:
        pred_f = jnp.pad(pred_f, (0, n_pad - n), constant_values=0.0)
        gt_f = jnp.pad(gt_f, (0, n_pad - n), constant_values=2.0)
    rows_pad = n_pad // _LANE

    pred2 = pred_f.reshape(rows_pad, _LANE)
    gt2 = gt_f.reshape(rows_pad, _LANE)

    # Effective tile: as large as requested but no larger than the data,
    # rounded to the dtype's minimum sublane multiple.
    tr = min(int(tile_rows), rows_pad)
    tr = max(sm, (tr // sm) * sm)

    total_tiles = _cdiv(rows_pad, tr)
    num_shards = max(1, min(int(num_shards), total_tiles))
    tiles_per_shard = _cdiv(total_tiles, num_shards)
    last_tile = total_tiles - 1

    # Trace-time specialization flags (Python constants baked into the kernel).
    full_last = (rows_pad % tr) == 0             # last tile has no edge padding
    no_dups = (total_tiles % num_shards) == 0    # no clamped duplicate tiles
    valid_rows_last = rows_pad - last_tile * tr  # real rows in the last tile

    def kernel(pred_ref, gt_ref, out_ref, acc_loss, acc_cnt):
        i = pl.program_id(1)

        @pl.when(i == 0)
        def _init():
            acc_loss[...] = jnp.zeros_like(acc_loss)
            acc_cnt[...] = jnp.zeros_like(acc_cnt)

        def accumulate(masked):
            p = pred_ref[...].astype(jnp.float32)
            g = gt_ref[...].astype(jnp.float32)
            if masked:
                # Only the final partial tile: neutralize rows past the end of
                # the padded array (Pallas edge-block contents are undefined).
                r = jax.lax.broadcasted_iota(jnp.int32, p.shape, 0)
                valid = r < valid_rows_last
                p = jnp.where(valid, p, 0.0)
                g = jnp.where(valid, g, 2.0)

            pos_mask = g == 1.0
            neg_mask = g < 1.0

            # Single transcendental: branches are mutually exclusive, so select
            # the log argument first (also avoids -inf * 0 on neutral values).
            log_x = jnp.log(jnp.where(pos_mask, p, 1.0 - p))

            one_m_p = 1.0 - p
            s = (1.0 - g) * (1.0 - g)               # (1 - gt)^2
            w = jnp.where(pos_mask, one_m_p * one_m_p,
                          jnp.where(neg_mask, p * p * (s * s), 0.0))

            loss = log_x * w
            cnt = pos_mask.astype(jnp.float32)

            # Vector-only accumulation into (8,128) accumulators (VPU adds);
            # the cross-lane reduce to scalars happens once, at finalize.
            sub = p.shape[0] // _SUBLANE
            acc_loss[...] += jnp.sum(loss.reshape(sub, _SUBLANE, _LANE), axis=0)
            acc_cnt[...] += jnp.sum(cnt.reshape(sub, _SUBLANE, _LANE), axis=0)

        if full_last and no_dups:
            # No partial tile, no duplicates: straight-line fast path.
            accumulate(masked=False)
        else:
            t = pl.program_id(0) * tiles_per_shard + i
            if full_last:
                # Only clamped duplicate tiles to skip — scalar guard.
                pl.when(t <= last_tile)(lambda: accumulate(masked=False))
            else:
                pl.when(t < last_tile)(lambda: accumulate(masked=False))
                pl.when(t == last_tile)(lambda: accumulate(masked=True))
                # t > last_tile (clamped duplicate): skipped entirely.

        @pl.when(i == pl.num_programs(1) - 1)
        def _finalize():
            out_ref[0, 0] = jnp.sum(acc_loss[...])
            out_ref[0, 1] = jnp.sum(acc_cnt[...])

    def in_map(s, i):
        t = s * tiles_per_shard + i
        return (jnp.minimum(t, last_tile), 0)

    # Make sure the double-buffered input tiles fit the scoped VMEM limit on
    # every generation (v5e default is only 16 MiB) without exceeding v7x's
    # 64 MiB physical VMEM.
    buf_bytes = 2 * tr * _LANE * (pred2.dtype.itemsize + gt2.dtype.itemsize)
    vmem_limit = int(min(48 << 20, max(32 << 20, buf_bytes + (4 << 20))))

    partials = pl.pallas_call(
        kernel,
        out_shape=jax.ShapeDtypeStruct((num_shards, 2), jnp.float32),
        grid_spec=pltpu.PrefetchScalarGridSpec(
            num_scalar_prefetch=0,
            grid=(num_shards, tiles_per_shard),
            in_specs=[
                pl.BlockSpec((tr, _LANE), in_map),
                pl.BlockSpec((tr, _LANE), in_map),
            ],
            out_specs=pl.BlockSpec(
                (1, 2), lambda s, i: (s, 0), memory_space=pltpu.SMEM
            ),
            scratch_shapes=[
                pltpu.VMEM((_SUBLANE, _LANE), jnp.float32),
                pltpu.VMEM((_SUBLANE, _LANE), jnp.float32),
            ],
        ),
        compiler_params=pltpu.CompilerParams(
            dimension_semantics=("parallel", "arbitrary"),
            vmem_limit_bytes=vmem_limit,
        ),
    )(pred2, gt2)

    total = jnp.sum(partials[:, 0])          # pos_loss + neg_loss
    num_pos = jnp.sum(partials[:, 1])
    # pos_loss is exactly 0 when num_pos == 0, so -(total)/max(num_pos, 1)
    # reproduces the reference's two-branch formula.
    return -total / jnp.maximum(num_pos, 1.0)


def _focal_loss_ref(pred, gt):
    """Plain-JAX reference mirroring the PyTorch code."""
    pred = pred.astype(jnp.float32)
    gt = gt.astype(jnp.float32)
    pos_inds = (gt == 1.0).astype(jnp.float32)
    neg_inds = (gt < 1.0).astype(jnp.float32)
    neg_weights = (1.0 - gt) ** 4
    pos_loss = jnp.sum(jnp.log(pred) * (1.0 - pred) ** 2 * pos_inds)
    neg_loss = jnp.sum(jnp.log(1.0 - pred) * pred ** 2 * neg_weights * neg_inds)
    num_pos = jnp.sum(pos_inds)
    return jnp.where(num_pos == 0.0, -neg_loss, -(pos_loss + neg_loss) / num_pos)


def _make_inputs(key, shape, n_peaks):
    k_pred, k_gt, k_pos = jax.random.split(key, 3)
    pred = jax.nn.sigmoid(jax.random.normal(k_pred, shape, jnp.float32))
    gt = jax.random.uniform(k_gt, shape, jnp.float32, 0.0, 0.999)
    if n_peaks > 0:
        n = 1
        for d in shape:
            n *= d
        flat_idx = jax.random.choice(k_pos, n, shape=(n_peaks,), replace=False)
        gt = gt.reshape(-1).at[flat_idx].set(1.0).reshape(shape)
    return pred, gt


if __name__ == "__main__":
    key = jax.random.PRNGKey(0)
    k1, k2, k3, k4 = jax.random.split(key, 4)

    def check(loss, ref, tag, rtol=1e-5, atol=1e-5):
        loss = jax.block_until_ready(loss)
        ref = jax.block_until_ready(ref)
        assert jnp.isfinite(loss), f"{tag}: non-finite loss"
        assert jnp.allclose(loss, ref, rtol=rtol, atol=atol), (tag, loss, ref)

    # 1) Main test: NCHW shape matching the module spec (batch x c x h x w).
    B, C, H, W = 2, 4, 16, 16
    pred, gt = _make_inputs(k1, (B, C, H, W), n_peaks=8)
    check(focal_loss(pred, gt), _focal_loss_ref(pred, gt), "main")

    # 2) Ragged size (not a multiple of 128) + small tiles + 2 shards with an
    #    odd tile count: exercises value padding, the masked last-tile branch
    #    and the duplicate-tile scalar guard.
    pred2, gt2 = _make_inputs(k2, (2, 1, 100, 61), n_peaks=5)
    check(focal_loss(pred2, gt2, tile_rows=40, num_shards=2),
          _focal_loss_ref(pred2, gt2), "ragged")

    # 3) Zero-positives case: validates the -total / max(num_pos, 1) rewrite.
    pred3, gt3 = _make_inputs(k3, (2, 4, 16, 16), n_peaks=0)
    check(focal_loss(pred3, gt3), _focal_loss_ref(pred3, gt3), "zero_pos")

    # 4) Multi-shard, exactly divisible tiling (pure fast path, parallel axis).
    pred4, gt4 = _make_inputs(k4, (2, 4, 16, 16), n_peaks=6)
    check(focal_loss(pred4, gt4, tile_rows=8, num_shards=2),
          _focal_loss_ref(pred4, gt4), "sharded")

    # 5) bf16 predictions in HBM (half the DMA bytes); kernel upcasts in-reg.
    pred5_bf16 = pred.astype(jnp.bfloat16)
    check(focal_loss(pred5_bf16, gt), _focal_loss_ref(pred5_bf16, gt),
          "bf16", rtol=1e-4, atol=1e-4)

    print("KERNEL_OK")
</pallas_src>

<mosaic_0001>
module attributes {stable_mosaic.version = 11 : i64} {
  func.func @kernel(%arg0: i32, %arg1: i32, %arg2: memref<16x128xf32, #tpu.memory_space<vmem>>, %arg3: memref<16x128xf32, #tpu.memory_space<vmem>>, %arg4: memref<1x2xf32, #tpu.memory_space<smem>>, %arg5: memref<8x128xf32, #tpu.memory_space<vmem>>, %arg6: memref<8x128xf32, #tpu.memory_space<vmem>>) attributes {dimension_semantics = [#tpu.dimension_semantics<parallel>, #tpu.dimension_semantics<arbitrary>], iteration_bounds = array<i64: 1, 1>, scalar_prefetch = 0 : i64, scratch_operands = 2 : i64, tpu.core_type = #tpu.core_type<tc>, window_params = [{transform_indices = @transform_0, window_bounds = array<i64: 16, 128>}, {transform_indices = @transform_1, window_bounds = array<i64: 16, 128>}, {transform_indices = @transform_2, window_bounds = array<i64: 1, 2>}]} {
    %c0_i32 = arith.constant 0 : i32
    %0 = arith.cmpi eq, %arg1, %c0_i32 : i32
    %1 = arith.extui %0 : i1 to i32
    %c0_i32_0 = arith.constant 0 : i32
    %2 = arith.cmpi ne, %1, %c0_i32_0 : i32
    scf.if %2 {
      %cst_22 = arith.constant 0.000000e+00 : f32
      %43 = vector.broadcast %cst_22 : f32 to vector<8x128xf32>
      %c0_23 = arith.constant 0 : index
      %c0_24 = arith.constant 0 : index
      %44 = vector.load %arg5[%c0_23, %c0_24] : memref<8x128xf32, #tpu.memory_space<vmem>>, vector<8x128xf32>
      tpu.vector_store %arg5[%c0_23, %c0_24], %43 {strides = array<i32>} : memref<8x128xf32, #tpu.memory_space<vmem>>, vector<8x128xf32>,
      %cst_25 = arith.constant 0.000000e+00 : f32
      %45 = vector.broadcast %cst_25 : f32 to vector<8x128xf32>
      %c0_26 = arith.constant 0 : index
      %c0_27 = arith.constant 0 : index
      %46 = vector.load %arg6[%c0_26, %c0_27] : memref<8x128xf32, #tpu.memory_space<vmem>>, vector<8x128xf32>
      tpu.vector_store %arg6[%c0_26, %c0_27], %45 {strides = array<i32>} : memref<8x128xf32, #tpu.memory_space<vmem>>, vector<8x128xf32>,
    } else {
    }
    %c0 = arith.constant 0 : index
    %c0_1 = arith.constant 0 : index
    %3 = vector.load %arg2[%c0, %c0_1] : memref<16x128xf32, #tpu.memory_space<vmem>>, vector<16x128xf32>
    %c0_2 = arith.constant 0 : index
    %c0_3 = arith.constant 0 : index
    %4 = vector.load %arg3[%c0_2, %c0_3] : memref<16x128xf32, #tpu.memory_space<vmem>>, vector<16x128xf32>
    %cst = arith.constant 1.000000e+00 : f32
    %5 = vector.broadcast %cst : f32 to vector<16x128xf32>
    %6 = arith.cmpf oeq, %4, %5 : vector<16x128xf32>
    %cst_4 = arith.constant 1.000000e+00 : f32
    %7 = vector.broadcast %cst_4 : f32 to vector<16x128xf32>
    %8 = arith.cmpf olt, %4, %7 : vector<16x128xf32>
    %cst_5 = arith.constant 1.000000e+00 : f32
    %9 = vector.broadcast %cst_5 : f32 to vector<16x128xf32>
    %10 = arith.subf %9, %3 : vector<16x128xf32>
    %11 = arith.select %6, %3, %10 : vector<16x128xi1>, vector<16x128xf32>
    %12 = math.log %11 : vector<16x128xf32>
    %cst_6 = arith.constant 1.000000e+00 : f32
    %13 = vector.broadcast %cst_6 : f32 to vector<16x128xf32>
    %14 = arith.subf %13, %3 : vector<16x128xf32>
    %cst_7 = arith.constant 1.000000e+00 : f32
    %15 = vector.broadcast %cst_7 : f32 to vector<16x128xf32>
    %16 = arith.subf %15, %4 : vector<16x128xf32>
    %cst_8 = arith.constant 1.000000e+00 : f32
    %17 = vector.broadcast %cst_8 : f32 to vector<16x128xf32>
    %18 = arith.subf %17, %4 : vector<16x128xf32>
    %19 = arith.mulf %16, %18 : vector<16x128xf32>
    %20 = arith.mulf %14, %14 : vector<16x128xf32>
    %21 = arith.mulf %3, %3 : vector<16x128xf32>
    %22 = arith.mulf %19, %19 : vector<16x128xf32>
    %23 = arith.mulf %21, %22 : vector<16x128xf32>
    %cst_9 = arith.constant 0.000000e+00 : f32
    %24 = vector.broadcast %cst_9 : f32 to vector<16x128xf32>
    %25 = arith.select %8, %23, %24 : vector<16x128xi1>, vector<16x128xf32>
    %26 = arith.select %6, %20, %25 : vector<16x128xi1>, vector<16x128xf32>
    %27 = arith.mulf %12, %26 : vector<16x128xf32>
    %28 = arith.extui %6 : vector<16x128xi1> to vector<16x128xi32>
    %29 = arith.sitofp %28 : vector<16x128xi32> to vector<16x128xf32>
    %c0_10 = arith.constant 0 : index
    %c0_11 = arith.constant 0 : index
    %30 = vector.load %arg5[%c0_10, %c0_11] : memref<8x128xf32, #tpu.memory_space<vmem>>, vector<8x128xf32>
    %31 = vector.shape_cast %27 : vector<16x128xf32> to vector<2x8x128xf32>
    %cst_12 = arith.constant dense<0.000000e+00> : vector<8x128xf32>
    %32 = vector.multi_reduction <add>, %31, %cst_12 [0] : vector<2x8x128xf32> to vector<8x128xf32>
    %33 = arith.addf %30, %32 : vector<8x128xf32>
    %c0_13 = arith.constant 0 : index
    %c0_14 = arith.constant 0 : index
    %34 = vector.load %arg5[%c0_13, %c0_14] : memref<8x128xf32, #tpu.memory_space<vmem>>, vector<8x128xf32>
    tpu.vector_store %arg5[%c0_13, %c0_14], %33 {strides = array<i32>} : memref<8x128xf32, #tpu.memory_space<vmem>>, vector<8x128xf32>,
    %c0_15 = arith.constant 0 : index
    %c0_16 = arith.constant 0 : index
    %35 = vector.load %arg6[%c0_15, %c0_16] : memref<8x128xf32, #tpu.memory_space<vmem>>, vector<8x128xf32>
    %36 = vector.shape_cast %29 : vector<16x128xf32> to vector<2x8x128xf32>
    %cst_17 = arith.constant dense<0.000000e+00> : vector<8x128xf32>
    %37 = vector.multi_reduction <add>, %36, %cst_17 [0] : vector<2x8x128xf32> to vector<8x128xf32>
    %38 = arith.addf %35, %37 : vector<8x128xf32>
    %c0_18 = arith.constant 0 : index
    %c0_19 = arith.constant 0 : index
    %39 = vector.load %arg6[%c0_18, %c0_19] : memref<8x128xf32, #tpu.memory_space<vmem>>, vector<8x128xf32>
    tpu.vector_store %arg6[%c0_18, %c0_19], %38 {strides = array<i32>} : memref<8x128xf32, #tpu.memory_space<vmem>>, vector<8x128xf32>,
    %c0_i32_20 = arith.constant 0 : i32
    %40 = arith.cmpi eq, %arg1, %c0_i32_20 : i32
    %41 = arith.extui %40 : i1 to i32
    %c0_i32_21 = arith.constant 0 : i32
    %42 = arith.cmpi ne, %41, %c0_i32_21 : i32
    scf.if %42 {
      %c0_22 = arith.constant 0 : index
      %c0_23 = arith.constant 0 : index
      %43 = vector.load %arg5[%c0_22, %c0_23] : memref<8x128xf32, #tpu.memory_space<vmem>>, vector<8x128xf32>
      %44 = vector.shape_cast %43 : vector<8x128xf32> to vector<1x8x128xf32>
      %cst_24 = arith.constant dense<0.000000e+00> : vector<1xf32>
      %45 = vector.multi_reduction <add>, %44, %cst_24 [1, 2] : vector<1x8x128xf32> to vector<1xf32>
      %46 = vector.shape_cast %45 : vector<1xf32> to vector<1x1x1xf32>
      %47 = vector.extract %46[0, 0, 0] : f32 from vector<1x1x1xf32>
      %c0_25 = arith.constant 0 : index
      %c0_26 = arith.constant 0 : index
      %48 = memref.load %arg4[%c0_25, %c0_26] : memref<1x2xf32, #tpu.memory_space<smem>>
      memref.store %47, %arg4[%c0_25, %c0_26] : memref<1x2xf32, #tpu.memory_space<smem>>
      %c0_27 = arith.constant 0 : index
      %c0_28 = arith.constant 0 : index
      %49 = vector.load %arg6[%c0_27, %c0_28] : memref<8x128xf32, #tpu.memory_space<vmem>>, vector<8x128xf32>
      %50 = vector.shape_cast %49 : vector<8x128xf32> to vector<1x8x128xf32>
      %cst_29 = arith.constant dense<0.000000e+00> : vector<1xf32>
      %51 = vector.multi_reduction <add>, %50, %cst_29 [1, 2] : vector<1x8x128xf32> to vector<1xf32>
      %52 = vector.shape_cast %51 : vector<1xf32> to vector<1x1x1xf32>
      %53 = vector.extract %52[0, 0, 0] : f32 from vector<1x1x1xf32>
      %c0_30 = arith.constant 0 : index
      %c1 = arith.constant 1 : index
      %54 = memref.load %arg4[%c0_30, %c1] : memref<1x2xf32, #tpu.memory_space<smem>>
      memref.store %53, %arg4[%c0_30, %c1] : memref<1x2xf32, #tpu.memory_space<smem>>
    } else {
    }
    return
  }
  func.func @transform_0(%arg0: i32, %arg1: i32) -> (i32, i32) {
    %c1_i32 = arith.constant 1 : i32
    %0 = arith.muli %arg0, %c1_i32 : i32
    %1 = arith.addi %0, %arg1 : i32
    %c0_i32 = arith.constant 0 : i32
    %2 = arith.minsi %1, %c0_i32 : i32
    %c0_i32_0 = arith.constant 0 : i32
    %c0_i32_1 = arith.constant 0 : i32
    return %2, %c0_i32_0 : i32, i32
  }
  func.func @transform_1(%arg0: i32, %arg1: i32) -> (i32, i32) {
    %c1_i32 = arith.constant 1 : i32
    %0 = arith.muli %arg0, %c1_i32 : i32
    %1 = arith.addi %0, %arg1 : i32
    %c0_i32 = arith.constant 0 : i32
    %2 = arith.minsi %1, %c0_i32 : i32
    %c0_i32_0 = arith.constant 0 : i32
    %c0_i32_1 = arith.constant 0 : i32
    return %2, %c0_i32_0 : i32, i32
  }
  func.func @transform_2(%arg0: i32, %arg1: i32) -> (i32, i32) {
    %c0_i32 = arith.constant 0 : i32
    %c0_i32_0 = arith.constant 0 : i32
    return %arg0, %c0_i32 : i32, i32
  }
}

</mosaic_0001>

<llo_original>
// kernel: tpu_custom_call.1
$region0: #{tpu_custom_call.1}
  #allocation0 [shape = 'u32[]', space=smem, size = 0x4, offset = 0x4, fixed_abs, tag = 'smem constant byte address 0x4 - core index']
  #allocation1 [shape = 'u32[144,128]{1,0:T(1,128)}', space=vmem, size = 0x12000, scoped, tag = 'internal scratch']
  #allocation2 [shape = 'f32[8,128]{1,0:T(8,128)}', space=vmem, size = 0x1000, scoped, tag = 'scratch operand']
  #allocation3 [shape = 'f32[8,128]{1,0:T(8,128)}', space=vmem, size = 0x1000, scoped, tag = 'scratch operand']
  %s0 = inlined_call_operand.hbm [shape: f32[16,128], index: 0, kind: input, shape index: {}]
  %s1 = inlined_call_operand.hbm [shape: f32[16,128], index: 1, kind: input, shape index: {}]
  %s2 = inlined_call_operand.hbm [shape: f32[1,2], index: 2, kind: output, shape index: {}]
  %s3 = sld [smem:[#allocation0]]
  $region34: #{tpu_custom_call.1} parent=0
    _
  %s5 = ssub.s32 1, %s3
  %s6 = scalar_select 0, %s5, %s3
  $region1: #{tpu_custom_call.1} parent=0
    #allocation4 [shape = 'u8[8192]{0}', space=vmem, size = 0x2000, scoped, tag = 'input window, operand 0, single buffered']
    #allocation5 [shape = 's32[1]{0}', space=sflag, size = 0x4, scoped, tag = 'scoped memory for tpu_custom_call.1']
    #allocation6 [shape = 's32[1]{0}', space=sflag, size = 0x4, scoped, tag = 'scoped memory for tpu_custom_call.1']
    #allocation7 [shape = 'u8[8192]{0}', space=vmem, size = 0x2000, scoped, tag = 'input window, operand 1, single buffered']
    #allocation8 [shape = 's32[1]{0}', space=sflag, size = 0x4, scoped, tag = 'scoped memory for tpu_custom_call.1']
    #allocation9 [shape = 'u8[512]{0}', space=smem, size = 0x200, scoped, tag = 'output window, operand 0, single buffered']
    %7 = vsyncpa [#allocation5], 0
    %8 = vsyncpa [#allocation8], 0
    %9 = vsyncpa [#allocation6], 0
    // Predicated region
    $region2: #{tpu_custom_call.1} parent=1 // pred_check
      _
    $region3: #{tpu_custom_call.1} parent=1 // pred_check_branch
      %11 = sbr.rel (0) target = $region5
    $region4: #{tpu_custom_call.1} parent=1 // pred_region
      %s12 = sadd.s32 0, 0
      %p13 = scmp.lt.s32.totalorder %s12, 0
      %s14 = scalar_select %p13, %s12, 0
      %s15 = smul.u32 2, %s14
      %s17 = ssub.s32 256, 256
      %18 = vsyncadd [#allocation5], %s17
      %s19 = smul.addr %s15, 128
      %s20 = scalar_lea.hbm %s0, %s19
      %s21 = sshll.u32 [#allocation4], 4
      %s22 = int_to_ptr.vmem [resolvable:$true] %s21
      %27 = dma.hbm_to_vmem [thread:$0]  %s20, 256, %s22, [#allocation5], 128, 128, 8
    $region5: #{tpu_custom_call.1} parent=1 // pred_fallthru
      _
    // Predicated region
    $region6: #{tpu_custom_call.1} parent=1 // pred_check
      _
    $region7: #{tpu_custom_call.1} parent=1 // pred_check_branch
      %29 = sbr.rel (0) target = $region9
    $region8: #{tpu_custom_call.1} parent=1 // pred_region
      %s30 = sadd.s32 0, 0
      %p31 = scmp.lt.s32.totalorder %s30, 0
      %s32 = scalar_select %p31, %s30, 0
      %s33 = smul.u32 2, %s32
      %s35 = ssub.s32 256, 256
      %36 = vsyncadd [#allocation8], %s35
      %s37 = smul.addr %s33, 128
      %s38 = scalar_lea.hbm %s1, %s37
      %s39 = sshll.u32 [#allocation7], 4
      %s40 = int_to_ptr.vmem [resolvable:$true] %s39
      %45 = dma.hbm_to_vmem [thread:$0]  %s38, 256, %s40, [#allocation8], 128, 128, 8
    $region9: #{tpu_custom_call.1} parent=1 // pred_fallthru
      _
    // Predicated region
    $region10: #{tpu_custom_call.1} parent=1 // pred_check
      _
    $region11: #{tpu_custom_call.1} parent=1 // pred_check_branch
      %47 = sbr.rel (0) target = $region13
    $region12: #{tpu_custom_call.1} parent=1 // pred_region
      %48 = dma.done [#allocation5], 256
    $region13: #{tpu_custom_call.1} parent=1 // pred_fallthru
      _
    // Predicated region
    $region14: #{tpu_custom_call.1} parent=1 // pred_check
      _
    $region15: #{tpu_custom_call.1} parent=1 // pred_check_branch
      %50 = sbr.rel (0) target = $region17
    $region16: #{tpu_custom_call.1} parent=1 // pred_region
      %51 = dma.done [#allocation8], 256
    $region17: #{tpu_custom_call.1} parent=1 // pred_fallthru
      _
    %s52 = sadd.s32 0, 0
    %p53 = scmp.lt.s32.totalorder %s52, 0
    %s54 = scalar_select %p53, %s52, 0
    %s55 = smul.u32 2, %s54
    %s56 = sadd.s32 0, 0
    %p57 = scmp.lt.s32.totalorder %s56, 0
    %s58 = scalar_select %p57, %s56, 0
    %s59 = smul.u32 2, %s58
    %p60 = scmp.eq.s32.totalorder 0, 0
    // Predicated region
    $region18: #{tpu_custom_call.1} parent=1 // pred_check
      %p61 = pneg %p60
    $region19: #{tpu_custom_call.1} parent=1 // pred_check_branch
      %63 = sbr.rel (%p61) target = $region21
    $region20: #{tpu_custom_call.1} parent=1 // pred_region
      %64 = vst [vmem:[#allocation2] sm:$0xff] 0.0
      %65 = vst [vmem:[#allocation3] sm:$0xff] 0.0
    $region21: #{tpu_custom_call.1} parent=1 // pred_fallthru
      _
    %v66 = vld [vmem:[#allocation4] sm:$0xff]
    %v67 = vld [vmem:[#allocation4 + $0x8] sm:$0xff]
    %v68 = vld [vmem:[#allocation7] sm:$0xff]
    %v69 = vld [vmem:[#allocation7 + $0x8] sm:$0xff]
    %vm70 = vcmp.eq.f32.partialorder %v68, 1.0
    %vm71 = vcmp.eq.f32.partialorder %v69, 1.0
    %vm72 = vcmp.lt.f32.partialorder %v68, 1.0
    %vm73 = vcmp.lt.f32.partialorder %v69, 1.0
    %v74 = vsub.f32 1.0, %v66
    %v75 = vsub.f32 1.0, %v67
    %v76 = vsel %vm70, %v66, %v74
    %v77 = vsel %vm71, %v67, %v75
    %v78 = vlog2.pop %v76
    %v79 = vmul.f32 %v78, 0.6931472
    %v80 = vlog2.pop %v77
    %v81 = vmul.f32 %v80, 0.6931472
    %v82 = vsub.f32 1.0, %v68
    %v83 = vsub.f32 1.0, %v69
    %v84 = vmul.f32 %v82, %v82
    %v85 = vmul.f32 %v83, %v83
    %v86 = vmul.f32 %v74, %v74
    %v87 = vmul.f32 %v75, %v75
    %v88 = vmul.f32 %v66, %v66
    %v89 = vmul.f32 %v67, %v67
    %v90 = vmul.f32 %v84, %v84
    %v91 = vmul.f32 %v85, %v85
    %v92 = vmul.f32 %v88, %v90
    %v93 = vmul.f32 %v89, %v91
    %v94 = vsel %vm72, %v92, 0.0
    %v95 = vsel %vm73, %v93, 0.0
    %v96 = vsel %vm70, %v86, %v94
    %v97 = vsel %vm71, %v87, %v95
    %v98 = vmul.f32 %v79, %v96
    %v99 = vmul.f32 %v81, %v97
    %v100 = vsel %vm70, 1, 0
    %v101 = vsel %vm71, 1, 0
    %v102 = vcvt.s32.f32 %v100
    %v103 = vcvt.s32.f32 %v101
    %v104 = vld [vmem:[#allocation2] sm:$0xff]
    %v105 = vadd.f32 %v98, %v99
    %v106 = vadd.f32 %v104, %v105
    %107 = vst [vmem:[#allocation2] sm:$0xff] %v106
    %v108 = vld [vmem:[#allocation3] sm:$0xff]
    %v109 = vadd.f32 %v102, %v103
    %v110 = vadd.f32 %v108, %v109
    %111 = vst [vmem:[#allocation3] sm:$0xff] %v110
    // Predicated region
    $region22: #{tpu_custom_call.1} parent=1 // pred_check
      %p112 = pneg %p60
    $region23: #{tpu_custom_call.1} parent=1 // pred_check_branch
      %114 = sbr.rel (%p112) target = $region25
    $region24: #{tpu_custom_call.1} parent=1 // pred_region
      %v115 = vld [vmem:[#allocation2] sm:$0xff]
      %116 = vadd.xlane.f32.xlu0 %v115
      %v117 = vpop.xlane.xlu0 %116
      %v118 = vrot.slane %v117, 4
      %v119 = vadd.f32 %v117, %v118
      %v120 = vrot.slane %v119, 2
      %v121 = vadd.f32 %v119, %v120
      %v122 = vrot.slane %v121, 1
      %v123 = vadd.f32 %v121, %v122
      %s124 = vtos %v123
      %s125 = scalar_lea.smem [#allocation9], 0
      %126 = sst [smem:[%s125]] %s124
      %v127 = vld [vmem:[#allocation3] sm:$0xff]
      %128 = vadd.xlane.f32.xlu0 %v127
      %v129 = vpop.xlane.xlu0 %128
      %v130 = vrot.slane %v129, 4
      %v131 = vadd.f32 %v129, %v130
      %v132 = vrot.slane %v131, 2
      %v133 = vadd.f32 %v131, %v132
      %v134 = vrot.slane %v133, 1
      %v135 = vadd.f32 %v133, %v134
      %s136 = vtos %v135
      %s137 = scalar_lea.smem [#allocation9], 1
      %138 = sst [smem:[%s137]] %s136
    $region25: #{tpu_custom_call.1} parent=1 // pred_fallthru
      _
    // Predicated region
    $region26: #{tpu_custom_call.1} parent=1 // pred_check
      _
    $region27: #{tpu_custom_call.1} parent=1 // pred_check_branch
      %140 = sbr.rel (0) target = $region29
    $region28: #{tpu_custom_call.1} parent=1 // pred_region
      %s142 = ssub.s32 16, 16
      %143 = vsyncadd [#allocation6], %s142
      %146 = dma.smem_to_hbm [#allocation9], 16, %s2, [#allocation6]
    $region29: #{tpu_custom_call.1} parent=1 // pred_fallthru
      _
    // Predicated region
    $region30: #{tpu_custom_call.1} parent=1 // pred_check
      _
    $region31: #{tpu_custom_call.1} parent=1 // pred_check_branch
      %148 = sbr.rel (0) target = $region33
    $region32: #{tpu_custom_call.1} parent=1 // pred_region
      %149 = dma.done [#allocation6], 16
    $region33: #{tpu_custom_call.1} parent=1 // pred_fallthru
      _
    %150 = sfence
    %151 = vsyncpa [#allocation5], 1
    %152 = vsyncpa [#allocation8], 1
    %153 = vsyncpa [#allocation6], 1

</llo_original>
